<compile_context>
chip_gen: v6e
topology: v6e:2x2x1
jax: 0.10.0
libtpu: 0.0.40
codegen_flags: <defaults>
</compile_context>

<pallas_src>
import math

import jax
import jax.numpy as jnp
from jax.experimental import pallas as pl
from jax.experimental.pallas import tpu as pltpu

_HP = jax.lax.Precision.HIGHEST  # keeps f32 conv / exact table lookups

# x_mark column order (freq='h'): 0=month(13), 1=day(32), 2=weekday(7), 3=hour(24)
_TEMPORAL_SIZES_H = (13, 32, 7, 24)


# ----------------------------------------------------------------------------
# Parameter construction (plain JAX glue) — mirrors the PyTorch __init__s.
# ----------------------------------------------------------------------------
def make_fixed_embedding_table(c_in: int, d_model: int) -> jnp.ndarray:
    """Frozen sinusoidal table, identical to FixedEmbedding.__init__."""
    position = jnp.arange(c_in, dtype=jnp.float32)[:, None]              # (c_in, 1)
    div_term = jnp.exp(
        jnp.arange(0, d_model, 2, dtype=jnp.float32)
        * -(math.log(10000.0) / d_model)
    )                                                                    # (d_model//2,)
    ang = position * div_term                                            # (c_in, d//2)
    w = jnp.zeros((c_in, d_model), dtype=jnp.float32)
    w = w.at[:, 0::2].set(jnp.sin(ang))
    w = w.at[:, 1::2].set(jnp.cos(ang))
    return w


def make_temporal_tables(d_model: int, sizes=_TEMPORAL_SIZES_H, pad_rows_to=128):
    """Per-feature tables + concatenated table zero-padded to a lane-friendly
    row count (>=128, multiple of 8) + per-feature row offsets."""
    tables = [make_fixed_embedding_table(s, d_model) for s in sizes]
    offsets, off = [], 0
    for s in sizes:
        offsets.append(off)
        off += s
    concat = jnp.concatenate(tables, axis=0)
    t = concat.shape[0]
    t_pad = max(pad_rows_to, ((t + 7) // 8) * 8)
    concat = jnp.pad(concat, ((0, t_pad - t), (0, 0)))
    return tables, concat, tuple(offsets)


def preprocess_marks(x_mark, sizes=_TEMPORAL_SIZES_H, offsets=None):
    """Clamp each time feature into its own sub-table (PyTorch nn.Embedding
    would raise on OOB; here we clamp) and pre-add the row offsets so the
    kernel sees direct row indices into the concatenated table."""
    if offsets is None:
        offsets, off = [], 0
        for s in sizes:
            offsets.append(off)
            off += s
    cols = []
    for f, (s, o) in enumerate(zip(sizes, offsets)):
        cols.append(jnp.clip(x_mark[..., f].astype(jnp.int32), 0, s - 1) + o)
    return jnp.stack(cols, axis=-1)                                       # (B, L, F) int32


def _pick_block_b(B: int, L: int, d_model: int, max_block_bytes: int = 8 << 20) -> int:
    """Largest divisor of B, capped at 8 and by a VMEM budget on the output
    block, that still leaves >= 2 grid steps (keeps both v7x TCs busy)."""
    cap = max(1, max_block_bytes // max(1, L * d_model * 4))
    best = 1
    for bb in range(1, min(B, 8, cap) + 1):
        if B % bb == 0 and B // bb >= 2:
            best = bb
    return best


# ----------------------------------------------------------------------------
# Fused kernel
# ----------------------------------------------------------------------------
def _data_embedding_kernel(x_ref, mark_ref, w_ref, tbl_ref, out_ref):
    bb, L, _ = x_ref.shape
    n_feat = mark_ref.shape[-1]
    t_pad = tbl_ref.shape[0]

    w = w_ref[...]        # (3*c_in, d_model)  conv taps stacked [prev; center; next]
    tbl = tbl_ref[...]    # (t_pad, d_model)   padded concatenated temporal table
    # Hoisted out of the batch loop (JAX does not CSE broadcast_in_dim).
    tcol = jax.lax.broadcasted_iota(jnp.int32, (L, t_pad), 1)

    for b in range(bb):   # bb <= 8, static unroll
        x = x_ref[b]                  # (L, c_in) float32
        marks = mark_ref[b]           # (L, F)    int32, offsets pre-added

        # --- TokenEmbedding: circular Conv1d(k=3, pad=1, no bias) -----------
        # Neighbours via XLU sublane rotations (free next to MXU/VPU, exact).
        x_prev = pltpu.roll(x, shift=1, axis=0)        # x[(l-1) % L]
        x_next = pltpu.roll(x, shift=L - 1, axis=0)    # x[(l+1) % L]  (== shift -1)
        x_cat = jnp.concatenate([x_prev, x, x_next], axis=-1)        # (L, 3*c_in)
        val = jnp.dot(x_cat, w, preferred_element_type=jnp.float32,
                      precision=_HP)                                  # (L, d_model)

        # --- TemporalEmbedding: sum of fixed lookups as ONE MXU matmul ------
        # Multi-hot (L, t_pad) mask (one 1 per feature, disjoint column
        # ranges) @ padded table == sum of the four embedding lookups.
        hit = tcol == marks[:, 0:1]
        for f in range(1, n_feat):
            hit = hit | (tcol == marks[:, f:f + 1])
        temporal = jnp.dot(hit.astype(jnp.float32), tbl,
                           preferred_element_type=jnp.float32,
                           precision=_HP)                             # (L, d_model)

        # TODO(synk): Dropout(p=0.1) is identity at inference; training-mode
        # dropout would use pltpu.prng_seed + pltpu.prng_random_bits here.
        out_ref[b] = (val + temporal).astype(out_ref.dtype)


def data_embedding_wo_pos(x, x_mark_off, conv_w, temporal_table, *,
                          block_b=None, out_dtype=jnp.float32):
    """Fused DataEmbeddingWoPos forward (embed_type='fixed', inference).

    x:              (B, L, c_in)  float32   value series
    x_mark_off:     (B, L, F)     int32     time indices, offsets pre-added
                                            (see preprocess_marks)
    conv_w:         (d_model, c_in, 3)      Conv1d weight (PyTorch layout)
    temporal_table: (T_pad, d_model)        padded concatenated fixed tables
    returns         (B, L, d_model) out_dtype
    """
    B, L, c_in = x.shape
    F = x_mark_off.shape[-1]
    d_model = conv_w.shape[0]
    t_pad = temporal_table.shape[0]

    # Fuse the three tiny-K conv taps into one (3*c_in, d_model) weight,
    # matching the in-kernel concat order [x_prev, x, x_next].
    w_cat = jnp.concatenate(
        [jnp.transpose(conv_w[:, :, 0]),
         jnp.transpose(conv_w[:, :, 1]),
         jnp.transpose(conv_w[:, :, 2])], axis=0).astype(jnp.float32)

    if block_b is None:
        block_b = _pick_block_b(B, L, d_model)
    assert B % block_b == 0, (B, block_b)
    nb = B // block_b

    out_bytes = B * L * d_model * jnp.dtype(out_dtype).itemsize
    flops = int(2 * B * L * d_model * (3 * c_in + t_pad))
    bytes_accessed = int(4 * (x.size + x_mark_off.size + w_cat.size
                              + temporal_table.size) + out_bytes)

    return pl.pallas_call(
        _data_embedding_kernel,
        out_shape=jax.ShapeDtypeStruct((B, L, d_model), out_dtype),
        grid_spec=pltpu.PrefetchScalarGridSpec(
            num_scalar_prefetch=0,
            grid=(nb,),
            in_specs=[
                pl.BlockSpec((block_b, L, c_in), lambda i: (i, 0, 0)),   # x slab
                pl.BlockSpec((block_b, L, F), lambda i: (i, 0, 0)),      # marks slab
                pl.BlockSpec((3 * c_in, d_model), lambda i: (0, 0)),     # fused conv w
                pl.BlockSpec((t_pad, d_model), lambda i: (0, 0)),        # temporal table
            ],
            out_specs=pl.BlockSpec((block_b, L, d_model), lambda i: (i, 0, 0)),
        ),
        compiler_params=pltpu.CompilerParams(
            dimension_semantics=("parallel",),
        ),
        cost_estimate=pl.CostEstimate(
            flops=flops, transcendentals=0, bytes_accessed=bytes_accessed),
    )(x, x_mark_off, w_cat, temporal_table)


# ----------------------------------------------------------------------------
# Pure-JAX reference (independent math) + demo
# ----------------------------------------------------------------------------
def reference_forward(x, x_mark, conv_w, tables):
    x_prev = jnp.roll(x, 1, axis=1)      # x[(l-1) % L]
    x_next = jnp.roll(x, -1, axis=1)     # x[(l+1) % L]
    val = (jnp.einsum("blc,cd->bld", x_prev, conv_w[:, :, 0].T, precision=_HP)
           + jnp.einsum("blc,cd->bld", x,      conv_w[:, :, 1].T, precision=_HP)
           + jnp.einsum("blc,cd->bld", x_next, conv_w[:, :, 2].T, precision=_HP))
    temporal = jnp.zeros_like(val)
    for f, tbl in enumerate(tables):
        temporal = temporal + jnp.take(tbl, x_mark[..., f], axis=0)
    return val + temporal


if __name__ == "__main__":
    key = jax.random.PRNGKey(0)

    # Small shapes consistent with the module: batch=2, seq=8, value channels=4,
    # d_model=32, freq='h' -> 4 time features. (d_model < 128 exercises masked
    # lanes; real Autoformer d_model >= 128 is the lane-dense design point.)
    B, L, c_in, d_model = 2, 8, 4, 32
    sizes = _TEMPORAL_SIZES_H

    k_x, k_w, *k_marks = jax.random.split(key, 2 + len(sizes))

    x = jax.random.normal(k_x, (B, L, c_in), dtype=jnp.float32)
    fan_in = c_in * 3
    conv_w = jax.random.normal(k_w, (d_model, c_in, 3), dtype=jnp.float32) * \
        (2.0 / fan_in) ** 0.5                        # kaiming-style deterministic init
    x_mark = jnp.stack(
        [jax.random.randint(k, (B, L), 0, s, dtype=jnp.int32)
         for k, s in zip(k_marks, sizes)], axis=-1)  # (B, L, 4)

    tables, temporal_table, offsets = make_temporal_tables(d_model, sizes)
    marks_off = preprocess_marks(x_mark, sizes, offsets)

    out = data_embedding_wo_pos(x, marks_off, conv_w, temporal_table)
    out = jax.block_until_ready(out)

    ref = reference_forward(x, x_mark, conv_w, tables)

    assert out.shape == (B, L, d_model), out.shape
    assert out.dtype == jnp.float32, out.dtype
    assert jnp.allclose(out, ref, atol=1e-4, rtol=1e-4), \
        float(jnp.max(jnp.abs(out - ref)))

    print("KERNEL_OK")
</pallas_src>

<mosaic_0001>
module attributes {stable_mosaic.version = 11 : i64} {
  func.func @_data_embedding_kernel(%arg0: i32, %arg1: memref<1x8x4xf32, #tpu.memory_space<vmem>>, %arg2: memref<1x8x4xi32, #tpu.memory_space<vmem>>, %arg3: memref<12x32xf32, #tpu.memory_space<vmem>>, %arg4: memref<128x32xf32, #tpu.memory_space<vmem>>, %arg5: memref<1x8x32xf32, #tpu.memory_space<vmem>>) attributes {dimension_semantics = [#tpu.dimension_semantics<parallel>], iteration_bounds = array<i64: 2>, scalar_prefetch = 0 : i64, scratch_operands = 0 : i64, tpu.core_type = #tpu.core_type<tc>, window_params = [{transform_indices = @transform_0, window_bounds = array<i64: 1, 8, 4>}, {transform_indices = @transform_1, window_bounds = array<i64: 1, 8, 4>}, {pipeline_mode = #tpu.pipeline_mode<synchronous>, transform_indices = @transform_2, window_bounds = array<i64: 12, 32>}, {pipeline_mode = #tpu.pipeline_mode<synchronous>, transform_indices = @transform_3, window_bounds = array<i64: 128, 32>}, {transform_indices = @transform_4, window_bounds = array<i64: 1, 8, 32>}]} {
    %c0 = arith.constant 0 : index
    %c0_0 = arith.constant 0 : index
    %0 = vector.load %arg3[%c0, %c0_0] : memref<12x32xf32, #tpu.memory_space<vmem>>, vector<12x32xf32>
    %c0_1 = arith.constant 0 : index
    %c0_2 = arith.constant 0 : index
    %1 = vector.load %arg4[%c0_1, %c0_2] : memref<128x32xf32, #tpu.memory_space<vmem>>, vector<128x32xf32>
    %2 = tpu.iota {dimensions = array<i32: 1>} : vector<8x128xi32>
    %c0_3 = arith.constant 0 : index
    %c0_4 = arith.constant 0 : index
    %c0_5 = arith.constant 0 : index
    %3 = vector.load %arg1[%c0_3, %c0_4, %c0_5] : memref<1x8x4xf32, #tpu.memory_space<vmem>>, vector<1x8x4xf32>
    %4 = vector.shape_cast %3 : vector<1x8x4xf32> to vector<8x4xf32>
    %c0_6 = arith.constant 0 : index
    %c0_7 = arith.constant 0 : index
    %c0_8 = arith.constant 0 : index
    %5 = vector.load %arg2[%c0_6, %c0_7, %c0_8] : memref<1x8x4xi32, #tpu.memory_space<vmem>>, vector<1x8x4xi32>
    %6 = vector.shape_cast %5 : vector<1x8x4xi32> to vector<8x4xi32>
    %c1_i32 = arith.constant 1 : i32
    %7 = tpu.dynamic_rotate %4 by %c1_i32 dim 0 : vector<8x4xf32>, i32 -> vector<8x4xf32>
    %c7_i32 = arith.constant 7 : i32
    %8 = tpu.dynamic_rotate %4 by %c7_i32 dim 0 : vector<8x4xf32>, i32 -> vector<8x4xf32>
    %9 = tpu.concatenate %7, %4, %8 in 1 : vector<8x4xf32>, vector<8x4xf32>, vector<8x4xf32> -> vector<8x12xf32>
    %cst = arith.constant dense<0.000000e+00> : vector<8x32xf32>
    %10 = tpu.matmul %9, %0, %cst {dimension_numbers = #tpu.dot_dimension_numbers<[1], [0], [0], [1], [0, 0, 1, 1], [], []>, precision = #tpu.contract_precision<fp32>} : vector<8x12xf32>, vector<12x32xf32>, vector<8x32xf32> -> vector<8x32xf32>
    %11 = vector.extract_strided_slice %6 {offsets = [0, 0], sizes = [8, 1], strides = [1, 1]} : vector<8x4xi32> to vector<8x1xi32>
    %12 = vector.broadcast %11 : vector<8x1xi32> to vector<8x128xi32>
    %13 = arith.cmpi eq, %2, %12 : vector<8x128xi32>
    %14 = vector.extract_strided_slice %6 {offsets = [0, 1], sizes = [8, 1], strides = [1, 1]} : vector<8x4xi32> to vector<8x1xi32>
    %15 = vector.broadcast %14 : vector<8x1xi32> to vector<8x128xi32>
    %16 = arith.cmpi eq, %2, %15 : vector<8x128xi32>
    %17 = arith.ori %13, %16 : vector<8x128xi1>
    %18 = vector.extract_strided_slice %6 {offsets = [0, 2], sizes = [8, 1], strides = [1, 1]} : vector<8x4xi32> to vector<8x1xi32>
    %19 = vector.broadcast %18 : vector<8x1xi32> to vector<8x128xi32>
    %20 = arith.cmpi eq, %2, %19 : vector<8x128xi32>
    %21 = arith.ori %17, %20 : vector<8x128xi1>
    %22 = vector.extract_strided_slice %6 {offsets = [0, 3], sizes = [8, 1], strides = [1, 1]} : vector<8x4xi32> to vector<8x1xi32>
    %23 = vector.broadcast %22 : vector<8x1xi32> to vector<8x128xi32>
    %24 = arith.cmpi eq, %2, %23 : vector<8x128xi32>
    %25 = arith.ori %21, %24 : vector<8x128xi1>
    %26 = arith.extui %25 : vector<8x128xi1> to vector<8x128xi32>
    %27 = arith.sitofp %26 : vector<8x128xi32> to vector<8x128xf32>
    %cst_9 = arith.constant dense<0.000000e+00> : vector<8x32xf32>
    %28 = tpu.matmul %27, %1, %cst_9 {dimension_numbers = #tpu.dot_dimension_numbers<[1], [0], [0], [1], [0, 0, 1, 1], [], []>, precision = #tpu.contract_precision<fp32>} : vector<8x128xf32>, vector<128x32xf32>, vector<8x32xf32> -> vector<8x32xf32>
    %29 = arith.addf %10, %28 : vector<8x32xf32>
    %c0_10 = arith.constant 0 : index
    %c0_11 = arith.constant 0 : index
    %c0_12 = arith.constant 0 : index
    %30 = vector.load %arg5[%c0_10, %c0_11, %c0_12] : memref<1x8x32xf32, #tpu.memory_space<vmem>>, vector<1x8x32xf32>
    %31 = vector.shape_cast %30 : vector<1x8x32xf32> to vector<8x32xf32>
    %32 = vector.shape_cast %29 : vector<8x32xf32> to vector<1x8x32xf32>
    tpu.vector_store %arg5[%c0_10, %c0_11, %c0_12], %32 {strides = array<i32>} : memref<1x8x32xf32, #tpu.memory_space<vmem>>, vector<1x8x32xf32>,
    return
  }
  func.func @transform_0(%arg0: i32) -> (i32, i32, i32) {
    %c0_i32 = arith.constant 0 : i32
    %c0_i32_0 = arith.constant 0 : i32
    %c0_i32_1 = arith.constant 0 : i32
    return %arg0, %c0_i32, %c0_i32_0 : i32, i32, i32
  }
  func.func @transform_1(%arg0: i32) -> (i32, i32, i32) {
    %c0_i32 = arith.constant 0 : i32
    %c0_i32_0 = arith.constant 0 : i32
    %c0_i32_1 = arith.constant 0 : i32
    return %arg0, %c0_i32, %c0_i32_0 : i32, i32, i32
  }
  func.func @transform_2(%arg0: i32) -> (i32, i32) {
    %c0_i32 = arith.constant 0 : i32
    %c0_i32_0 = arith.constant 0 : i32
    %c0_i32_1 = arith.constant 0 : i32
    return %c0_i32, %c0_i32_0 : i32, i32
  }
  func.func @transform_3(%arg0: i32) -> (i32, i32) {
    %c0_i32 = arith.constant 0 : i32
    %c0_i32_0 = arith.constant 0 : i32
    %c0_i32_1 = arith.constant 0 : i32
    return %c0_i32, %c0_i32_0 : i32, i32
  }
  func.func @transform_4(%arg0: i32) -> (i32, i32, i32) {
    %c0_i32 = arith.constant 0 : i32
    %c0_i32_0 = arith.constant 0 : i32
    %c0_i32_1 = arith.constant 0 : i32
    return %arg0, %c0_i32, %c0_i32_0 : i32, i32, i32
  }
}

</mosaic_0001>

<llo_original>
// kernel: tpu_custom_call.1
$region0: #{tpu_custom_call.1}
  #allocation0 [shape = 'u32[]', space=smem, size = 0x4, offset = 0x4, fixed_abs, tag = 'smem constant byte address 0x4 - core index']
  #allocation1 [shape = 'u32[144,128]{1,0:T(1,128)}', space=vmem, size = 0x12000, scoped, tag = 'internal scratch']
  %s0 = inlined_call_operand.vmem [shape: f32[2,8,4], index: 0, kind: input, shape index: {}]
  %s1 = inlined_call_operand.vmem [shape: s32[2,8,4], index: 1, kind: input, shape index: {}]
  %s2 = inlined_call_operand.vmem [shape: f32[12,32], index: 2, kind: input, shape index: {}]
  %s3 = inlined_call_operand.vmem [shape: f32[128,32], index: 3, kind: input, shape index: {}]
  %s4 = inlined_call_operand.hbm [shape: f32[2,8,32], index: 4, kind: output, shape index: {}]
  %s5 = sld [smem:[#allocation0]]
  $region49: #{tpu_custom_call.1} parent=0
    _
  %s7 = ssub.s32 1, %s5
  %s8 = scalar_select 0, %s7, %s5
  $region1: #{tpu_custom_call.1} parent=0
    #allocation2 [shape = 'u8[8192]{0}', space=vmem, size = 0x2000, scoped, tag = 'output window, operand 0']
    #allocation3 [shape = 's32[2]{0}', space=sflag, size = 0x8, scoped, tag = 'scoped memory for tpu_custom_call.1']
    %9 = vsyncpa [#allocation3], 0
    %s10 = scalar_lea.sflag [#allocation3], 1
    %11 = vsyncpa %s10, 0
    loop: start=0, step=1, limit=4
    $region2: #{tpu_custom_call.1} parent=1 // loop_pre_header
      _
    $region3: #{tpu_custom_call.1} parent=1 // loop_header
      %s13 = sphi 0, %s17
      %p14 = scmp.ge.s32.totalorder %s13, 4
      %s23 = sphi 0, %s25
      %s26 = sphi 0, %s23
      %s27 = sphi 0, %s26
      %s43 = sphi 0, %s27
      %s49 = sphi 0, %s51
      %s52 = sphi 0, %s49
      %s53 = sphi 0, %s52
      %s69 = sphi 0, %s53
      %s73 = sphi 0, %s73
      %s75 = sphi 0, %s73
      %s76 = sphi 0, %s75
      %s90 = sphi 0, %s76
      %s94 = sphi 0, %s94
      %s96 = sphi 0, %s94
      %s97 = sphi 0, %s96
      %s111 = sphi 0, %s97
      %s117 = sphi 0, %s119
      %s120 = sphi 0, %s117
      %s121 = sphi 0, %s120
      %s137 = sphi 0, %s121
    $region4: #{tpu_custom_call.1} parent=1 // loop_header_branch
      %16 = sbr.rel (%p14) target = $region8
    $region5: #{tpu_custom_call.1} parent=1 // loop_body
      %s18 = ssub.s32 %s13, 1
      %s19 = ssub.s32 %s13, 2
      %s20 = sadd.s32 %s13, 1
      %s21 = ssub.s32 %s13, %s20
      %p22 = scmp.eq.s32.totalorder %s21, 0
      %s24 = sadd.s32 %s23, 1
      %s25 = scalar_select %p22, %s23, %s24
      %p28 = pneg %p22
      %p29 = scmp.eq.s32.totalorder %s13, 1
      %p30 = por %p28, %p29
      %p31 = scmp.ne.s32.totalorder %s23, %s26
      %p32 = scmp.eq.s32.totalorder %s13, 0
      %p33 = por %p31, %p32
      %p34 = scmp.ne.s32.totalorder %s23, %s26
      %p35 = scmp.eq.s32.totalorder %s18, 1
      %p36 = por %p34, %p35
      %p37 = scmp.ne.s32.totalorder %s26, %s27
      %p38 = scmp.eq.s32.totalorder %s18, 0
      %p39 = por %p37, %p38
      %p40 = scmp.ne.s32.totalorder %s26, %s27
      %p41 = scmp.eq.s32.totalorder %s19, 1
      %p42 = por %p40, %p41
      %p44 = scmp.ne.s32.totalorder %s27, %s43
      %p45 = scmp.eq.s32.totalorder %s19, 0
      %p46 = por %p44, %p45
      %s47 = ssub.s32 %s13, %s20
      %p48 = scmp.eq.s32.totalorder %s47, 0
      %s50 = sadd.s32 %s49, 1
      %s51 = scalar_select %p48, %s49, %s50
      %p54 = pneg %p48
      %p55 = scmp.eq.s32.totalorder %s13, 1
      %p56 = por %p54, %p55
      %p57 = scmp.ne.s32.totalorder %s49, %s52
      %p58 = scmp.eq.s32.totalorder %s13, 0
      %p59 = por %p57, %p58
      %p60 = scmp.ne.s32.totalorder %s49, %s52
      %p61 = scmp.eq.s32.totalorder %s18, 1
      %p62 = por %p60, %p61
      %p63 = scmp.ne.s32.totalorder %s52, %s53
      %p64 = scmp.eq.s32.totalorder %s18, 0
      %p65 = por %p63, %p64
      %p66 = scmp.ne.s32.totalorder %s52, %s53
      %p67 = scmp.eq.s32.totalorder %s19, 1
      %p68 = por %p66, %p67
      %p70 = scmp.ne.s32.totalorder %s53, %s69
      %p71 = scmp.eq.s32.totalorder %s19, 0
      %p72 = por %p70, %p71
      %s74 = sadd.s32 %s73, 1
      %p77 = scmp.eq.s32.totalorder %s13, 1
      %p78 = scmp.ne.s32.totalorder %s73, %s75
      %p79 = scmp.eq.s32.totalorder %s13, 0
      %p80 = por %p78, %p79
      %p81 = scmp.ne.s32.totalorder %s73, %s75
      %p82 = scmp.eq.s32.totalorder %s18, 1
      %p83 = por %p81, %p82
      %p84 = scmp.ne.s32.totalorder %s75, %s76
      %p85 = scmp.eq.s32.totalorder %s18, 0
      %p86 = por %p84, %p85
      %p87 = scmp.ne.s32.totalorder %s75, %s76
      %p88 = scmp.eq.s32.totalorder %s19, 1
      %p89 = por %p87, %p88
      %p91 = scmp.ne.s32.totalorder %s76, %s90
      %p92 = scmp.eq.s32.totalorder %s19, 0
      %p93 = por %p91, %p92
      %s95 = sadd.s32 %s94, 1
      %p98 = scmp.eq.s32.totalorder %s13, 1
      %p99 = scmp.ne.s32.totalorder %s94, %s96
      %p100 = scmp.eq.s32.totalorder %s13, 0
      %p101 = por %p99, %p100
      %p102 = scmp.ne.s32.totalorder %s94, %s96
      %p103 = scmp.eq.s32.totalorder %s18, 1
      %p104 = por %p102, %p103
      %p105 = scmp.ne.s32.totalorder %s96, %s97
      %p106 = scmp.eq.s32.totalorder %s18, 0
      %p107 = por %p105, %p106
      %p108 = scmp.ne.s32.totalorder %s96, %s97
      %p109 = scmp.eq.s32.totalorder %s19, 1
      %p110 = por %p108, %p109
      %p112 = scmp.ne.s32.totalorder %s97, %s111
      %p113 = scmp.eq.s32.totalorder %s19, 0
      %p114 = por %p112, %p113
      %s115 = ssub.s32 %s13, %s20
      %p116 = scmp.eq.s32.totalorder %s115, 0
      %s118 = sadd.s32 %s117, 1
      %s119 = scalar_select %p116, %s117, %s118
      %p122 = pneg %p116
      %p123 = scmp.eq.s32.totalorder %s13, 1
      %p124 = por %p122, %p123
      %p125 = scmp.ne.s32.totalorder %s117, %s120
      %p126 = scmp.eq.s32.totalorder %s13, 0
      %p127 = por %p125, %p126
      %p128 = scmp.ne.s32.totalorder %s117, %s120
      %p129 = scmp.eq.s32.totalorder %s18, 1
      %p130 = por %p128, %p129
      %p131 = scmp.ne.s32.totalorder %s120, %s121
      %p132 = scmp.eq.s32.totalorder %s18, 0
      %p133 = por %p131, %p132
      %p134 = scmp.ne.s32.totalorder %s120, %s121
      %p135 = scmp.eq.s32.totalorder %s19, 1
      %p136 = por %p134, %p135
      %p138 = scmp.ne.s32.totalorder %s121, %s137
      %p139 = scmp.eq.s32.totalorder %s19, 0
      %p140 = por %p138, %p139
      %p141 = scmp.le.s32.totalorder 1, %s13
      %p142 = scmp.lt.s32.totalorder %s13, 3
      %p143 = pnand %p141, %p142
      %p144 = pneg %p143
      // Predicated region
      $region9: #{tpu_custom_call.1} parent=5 // pred_check
        _
      $region10: #{tpu_custom_call.1} parent=5 // pred_check_branch
        %146 = sbr.rel (%p143) target = $region12
      $region11: #{tpu_custom_call.1} parent=5 // pred_region
        %s147 = ssub.s32 %s13, 1
        // Predicated region
        $region13: #{tpu_custom_call.1} parent=11 // pred_check
          %p148 = pneg %p86
        $region14: #{tpu_custom_call.1} parent=11 // pred_check_branch
          %150 = sbr.rel (%p148) target = $region16
        $region15: #{tpu_custom_call.1} parent=11 // pred_region
          _
        $region16: #{tpu_custom_call.1} parent=11 // pred_fallthru
          _
        // Predicated region
        $region17: #{tpu_custom_call.1} parent=11 // pred_check
          %p151 = pneg %p107
        $region18: #{tpu_custom_call.1} parent=11 // pred_check_branch
          %153 = sbr.rel (%p151) target = $region20
        $region19: #{tpu_custom_call.1} parent=11 // pred_region
          _
        $region20: #{tpu_custom_call.1} parent=11 // pred_fallthru
          _
      $region12: #{tpu_custom_call.1} parent=5 // pred_fallthru
        _
      %p154 = scmp.lt.s32.totalorder %s13, 2
      // Predicated region
      $region21: #{tpu_custom_call.1} parent=5 // pred_check
        %p155 = pneg %p154
      $region22: #{tpu_custom_call.1} parent=5 // pred_check_branch
        %157 = sbr.rel (%p155) target = $region24
      $region23: #{tpu_custom_call.1} parent=5 // pred_region
        // Predicated region
        $region25: #{tpu_custom_call.1} parent=23 // pred_check
          %p158 = pneg %p33
        $region26: #{tpu_custom_call.1} parent=23 // pred_check_branch
          %160 = sbr.rel (%p158) target = $region28
        $region27: #{tpu_custom_call.1} parent=23 // pred_region
          %p161 = scmp.lt.s32.totalorder %s13, 1
          %s162 = scalar_select %p161, %s13, 1
          %s163 = smul.addr %s162, 8
          %s164 = scalar_lea.vmem %s0, %s163
        $region28: #{tpu_custom_call.1} parent=23 // pred_fallthru
          _
        // Predicated region
        $region29: #{tpu_custom_call.1} parent=23 // pred_check
          %p165 = pneg %p59
        $region30: #{tpu_custom_call.1} parent=23 // pred_check_branch
          %167 = sbr.rel (%p165) target = $region32
        $region31: #{tpu_custom_call.1} parent=23 // pred_region
          %p168 = scmp.lt.s32.totalorder %s13, 1
          %s169 = scalar_select %p168, %s13, 1
          %s170 = smul.addr %s169, 8
          %s171 = scalar_lea.vmem %s1, %s170
        $region32: #{tpu_custom_call.1} parent=23 // pred_fallthru
          _
      $region24: #{tpu_custom_call.1} parent=5 // pred_fallthru
        _
      %p172 = scmp.le.s32.totalorder 1, %s13
      %p173 = scmp.lt.s32.totalorder %s13, 3
      %p174 = pnand %p172, %p173
      %p175 = pneg %p174
      // Predicated region
      $region33: #{tpu_custom_call.1} parent=5 // pred_check
        _
      $region34: #{tpu_custom_call.1} parent=5 // pred_check_branch
        %177 = sbr.rel (%p174) target = $region36
      $region35: #{tpu_custom_call.1} parent=5 // pred_region
        %s178 = ssub.s32 %s13, 1
        %p179 = scmp.lt.s32.totalorder %s18, 1
        %s180 = scalar_select %p179, %s18, 1
        %s181 = smul.addr %s180, 8
        %s182 = scalar_lea.vmem %s0, %s181
        %p183 = pneg %p39
        %p184 = pneg %p36
        %p185 = scmp.lt.s32.totalorder %s18, 1
        %s186 = scalar_select %p185, %s18, 1
        %s187 = smul.addr %s186, 8
        %s188 = scalar_lea.vmem %s1, %s187
        %p189 = pneg %p65
        %p190 = pneg %p62
        %p191 = pneg %p86
        %p192 = pneg %p83
        %p193 = pneg %p107
        %p194 = pneg %p104
        %p195 = pneg %p133
        %p196 = pneg %p130
        %s197 = sand.u32 %s120, 1
        %s198 = scalar_lea.sflag [#allocation3], %s197
        %s199 = sand.u32 %s120, 1
        %s200 = smul.addr %s199, 8
        %s201 = scalar_lea.vmem [#allocation2], %s200
        %p202 = scmp.lt.s32.totalorder %s18, 1
        %s203 = scalar_select %p202, %s18, 1
        %s204 = smul.addr %s203, 8
        %s205 = scalar_lea.vmem %s0, %s204
        %p206 = scmp.lt.s32.totalorder %s18, 1
        %s207 = scalar_select %p206, %s18, 1
        %s208 = smul.addr %s207, 8
        %s209 = scalar_lea.vmem %s1, %s208
        %v210 = vld [vmem:[%s2] sm:$0xff]
        %v211 = vld [vmem:[%s2 + $0x8] sm:$0xf]
        %v212 = vld [vmem:[%s3] sm:$0xff]
        %v213 = vld [vmem:[%s3 + $0x8] sm:$0xff]
        %v214 = vld [vmem:[%s3 + $0x10] sm:$0xff]
        %v215 = vld [vmem:[%s3 + $0x18] sm:$0xff]
        %v216 = vld [vmem:[%s3 + $0x20] sm:$0xff]
        %v217 = vld [vmem:[%s3 + $0x28] sm:$0xff]
        %v218 = vld [vmem:[%s3 + $0x30] sm:$0xff]
        %v219 = vld [vmem:[%s3 + $0x38] sm:$0xff]
        %v220 = vld [vmem:[%s3 + $0x40] sm:$0xff]
        %v221 = vld [vmem:[%s3 + $0x48] sm:$0xff]
        %v222 = vld [vmem:[%s3 + $0x50] sm:$0xff]
        %v223 = vld [vmem:[%s3 + $0x58] sm:$0xff]
        %v224 = vld [vmem:[%s3 + $0x60] sm:$0xff]
        %v225 = vld [vmem:[%s3 + $0x68] sm:$0xff]
        %v226 = vld [vmem:[%s3 + $0x70] sm:$0xff]
        %v227 = vld [vmem:[%s3 + $0x78] sm:$0xff]
        %v228 = vlaneseq
        %v229 = vand.u32 %v228, 127
        %v230 = vld [vmem:[%s205] sm:$0xff]
        %v231 = vld [vmem:[%s209] sm:$0xff]
        %v232 = vrot.slane %v230, 7
        %v233 = vrot.slane %v230, 1
        %235 = vrot.lane.b32.xlu0 %v230, 4
        %v236 = vpop.permute.xlu0 %235
        %239 = vrot.lane.b32.xlu0 %v233, 8
        %v240 = vpop.permute.xlu0 %239
        %vm242 = vcmask 31744
        %v243 = vsel %vm242, %v232, %v236
        %vm244 = vcmask 64512
        %v245 = vsel %vm244, %v243, %v240
        %246 = vset.pattern.permute.xlu0 0
        %247 = vperm.xlu0 %246, %v231
        %v248 = vpop.permute.xlu0 %247
        %vm249 = vcmp.eq.s32.totalorder %v229, %v248
        %250 = vset.pattern.permute.xlu0 1
        %251 = vperm.xlu0 %250, %v231
        %v252 = vpop.permute.xlu0 %251
        %vm253 = vcmp.eq.s32.totalorder %v229, %v252
        %vm254 = vmor %vm249, %vm253
        %255 = vset.pattern.permute.xlu0 2
        %256 = vperm.xlu0 %255, %v231
        %v257 = vpop.permute.xlu0 %256
        %vm258 = vcmp.eq.s32.totalorder %v229, %v257
        %vm259 = vmor %vm254, %vm258
        %260 = vset.pattern.permute.xlu0 3
        %261 = vperm.xlu0 %260, %v231
        %v262 = vpop.permute.xlu0 %261
        %vm263 = vcmp.eq.s32.totalorder %v229, %v262
        %vm264 = vmor %vm259, %vm263
        %v265 = vsel %vm264, 1, 0
        %v266 = vcvt.s32.f32 %v265
        %267 = vmatprep.subr.mxu0 0.0
        %v268 = vand.u32 %v227, 4294901760
        %269 = vmatpush1.msra.mxu0 %v268
        %270 = vmatprep.subr.mxu0 0.0
        %v271 = vand.u32 %v226, 4294901760
        %272 = vmatpush1.msra.mxu0 %v271
        %273 = vmatprep.subr.mxu0 0.0
        %v274 = vand.u32 %v225, 4294901760
        %275 = vmatpush1.msra.mxu0 %v274
        %276 = vmatprep.subr.mxu0 0.0
        %v277 = vand.u32 %v224, 4294901760
        %278 = vmatpush1.msra.mxu0 %v277
        %279 = vmatprep.subr.mxu0 0.0
        %v280 = vand.u32 %v223, 4294901760
        %281 = vmatpush1.msra.mxu0 %v280
        %282 = vmatprep.subr.mxu0 0.0
        %v283 = vand.u32 %v222, 4294901760
        %284 = vmatpush1.msra.mxu0 %v283
        %285 = vmatprep.subr.mxu0 0.0
        %v286 = vand.u32 %v221, 4294901760
        %287 = vmatpush1.msra.mxu0 %v286
        %288 = vmatprep.subr.mxu0 0.0
        %v289 = vand.u32 %v220, 4294901760
        %290 = vmatpush1.msra.mxu0 %v289
        %291 = vmatprep.subr.mxu0 0.0
        %v292 = vand.u32 %v219, 4294901760
        %293 = vmatpush1.msra.mxu0 %v292
        %294 = vmatprep.subr.mxu0 0.0
        %v295 = vand.u32 %v218, 4294901760
        %296 = vmatpush1.msra.mxu0 %v295
        %297 = vmatprep.subr.mxu0 0.0
        %v298 = vand.u32 %v217, 4294901760
        %299 = vmatpush1.msra.mxu0 %v298
        %300 = vmatprep.subr.mxu0 0.0
        %v301 = vand.u32 %v216, 4294901760
        %302 = vmatpush1.msra.mxu0 %v301
        %303 = vmatprep.subr.mxu0 0.0
        %v304 = vand.u32 %v215, 4294901760
        %305 = vmatpush1.msra.mxu0 %v304
        %306 = vmatprep.subr.mxu0 0.0
        %v307 = vand.u32 %v214, 4294901760
        %308 = vmatpush1.msra.mxu0 %v307
        %309 = vmatprep.subr.mxu0 0.0
        %v310 = vand.u32 %v213, 4294901760
        %311 = vmatpush1.msra.mxu0 %v310
        %312 = vmatprep.subr.mxu0 0.0
        %v313 = vand.u32 %v212, 4294901760
        %314 = vmatpush1.msra.mxu0 %v313
        %315 = vmatprep.subr.mxu0 0.0
        %316 = vmatpush2.msra.mxu0 0.0
        %317 = vmatprep.subr.mxu0 0.0
        %318 = vmatpush2.msra.mxu0 0.0
        %319 = vmatprep.subr.mxu0 0.0
        %320 = vmatpush2.msra.mxu0 0.0
        %321 = vmatprep.subr.mxu0 0.0
        %322 = vmatpush2.msra.mxu0 0.0
        %323 = vmatprep.subr.mxu0 0.0
        %324 = vmatpush2.msra.mxu0 0.0
        %325 = vmatprep.subr.mxu0 0.0
        %326 = vmatpush2.msra.mxu0 0.0
        %327 = vmatprep.subr.mxu0 0.0
        %328 = vmatpush2.msra.mxu0 0.0
        %329 = vmatprep.subr.mxu0 0.0
        %330 = vmatpush2.msra.mxu0 0.0
        %331 = vmatprep.subr.mxu0 0.0
        %332 = vmatpush2.msra.mxu0 0.0
        %333 = vmatprep.subr.mxu0 0.0
        %334 = vmatpush2.msra.mxu0 0.0
        %335 = vmatprep.subr.mxu0 0.0
        %336 = vmatpush2.msra.mxu0 0.0
        %337 = vmatprep.subr.mxu0 0.0
        %338 = vmatpush2.msra.mxu0 0.0
        %339 = vmatprep.subr.mxu0 0.0
        %340 = vmatpush2.msra.mxu0 0.0
        %341 = vmatprep.subr.mxu0 0.0
        %342 = vmatpush2.msra.mxu0 0.0
        %343 = vmatprep.subr.mxu0 0.0
        %344 = vmatpush2.msra.mxu0 0.0
        %345 = vmatprep.subr.mxu0 0.0
        %346 = vmatpush2.msra.mxu0 0.0
        %347 = vmatprep.mubr.f32.mxu0 0.0
        %v348 = vand.u32 %v266, 4294901760
        %v349 = vsub.f32 %v266, %v348
        %v350 = vand.u32 %v349, 4294901760
        %v351 = vsub.f32 %v349, %v350
        %v352 = vand.u32 %v351, 4294901760
        %353 = vmatmul.mubr.f32.gmra.mxu0 %v352
        %v354 = vpop.f32.mrf.mxu0
        %v355 = vadd.f32 0.0, %v354
        %v356 = vpop.f32.mrf.mxu0
        %357 = vdwg.mxu0
        %358 = vmatprep.subr.mxu0 0.0
        %v359 = vand.u32 %v227, 4294901760
        %v360 = vsub.f32 %v227, %v359
        %v361 = vand.u32 %v360, 4294901760
        %v362 = vsub.f32 %v360, %v361
        %v363 = vand.u32 %v362, 4294901760
        %364 = vmatpush1.msra.mxu0 %v363
        %365 = vmatprep.subr.mxu0 0.0
        %v366 = vand.u32 %v226, 4294901760
        %v367 = vsub.f32 %v226, %v366
        %v368 = vand.u32 %v367, 4294901760
        %v369 = vsub.f32 %v367, %v368
        %v370 = vand.u32 %v369, 4294901760
        %371 = vmatpush1.msra.mxu0 %v370
        %372 = vmatprep.subr.mxu0 0.0
        %v373 = vand.u32 %v225, 4294901760
        %v374 = vsub.f32 %v225, %v373
        %v375 = vand.u32 %v374, 4294901760
        %v376 = vsub.f32 %v374, %v375
        %v377 = vand.u32 %v376, 4294901760
        %378 = vmatpush1.msra.mxu0 %v377
        %379 = vmatprep.subr.mxu0 0.0
        %v380 = vand.u32 %v224, 4294901760
        %v381 = vsub.f32 %v224, %v380
        %v382 = vand.u32 %v381, 4294901760
        %v383 = vsub.f32 %v381, %v382
        %v384 = vand.u32 %v383, 4294901760
        %385 = vmatpush1.msra.mxu0 %v384
        %386 = vmatprep.subr.mxu0 0.0
        %v387 = vand.u32 %v223, 4294901760
        %v388 = vsub.f32 %v223, %v387
        %v389 = vand.u32 %v388, 4294901760
        %v390 = vsub.f32 %v388, %v389
        %v391 = vand.u32 %v390, 4294901760
        %392 = vmatpush1.msra.mxu0 %v391
        %393 = vmatprep.subr.mxu0 0.0
        %v394 = vand.u32 %v222, 4294901760
        %v395 = vsub.f32 %v222, %v394
        %v396 = vand.u32 %v395, 4294901760
        %v397 = vsub.f32 %v395, %v396
        %v398 = vand.u32 %v397, 4294901760
        %399 = vmatpush1.msra.mxu0 %v398
        %400 = vmatprep.subr.mxu0 0.0
        %v401 = vand.u32 %v221, 4294901760
        %v402 = vsub.f32 %v221, %v401
        %v403 = vand.u32 %v402, 4294901760
        %v404 = vsub.f32 %v402, %v403
        %v405 = vand.u32 %v404, 4294901760
        %406 = vmatpush1.msra.mxu0 %v405
        %407 = vmatprep.subr.mxu0 0.0
        %v408 = vand.u32 %v220, 4294901760
        %v409 = vsub.f32 %v220, %v408
        %v410 = vand.u32 %v409, 4294901760
        %v411 = vsub.f32 %v409, %v410
        %v412 = vand.u32 %v411, 4294901760
        %413 = vmatpush1.msra.mxu0 %v412
        %414 = vmatprep.subr.mxu0 0.0
        %v415 = vand.u32 %v219, 4294901760
        %v416 = vsub.f32 %v219, %v415
        %v417 = vand.u32 %v416, 4294901760
        %v418 = vsub.f32 %v416, %v417
        %v419 = vand.u32 %v418, 4294901760
        %420 = vmatpush1.msra.mxu0 %v419
        %421 = vmatprep.subr.mxu0 0.0
        %v422 = vand.u32 %v218, 4294901760
        %v423 = vsub.f32 %v218, %v422
        %v424 = vand.u32 %v423, 4294901760
        %v425 = vsub.f32 %v423, %v424
        %v426 = vand.u32 %v425, 4294901760
        %427 = vmatpush1.msra.mxu0 %v426
        %428 = vmatprep.subr.mxu0 0.0
        %v429 = vand.u32 %v217, 4294901760
        %v430 = vsub.f32 %v217, %v429
        %v431 = vand.u32 %v430, 4294901760
        %v432 = vsub.f32 %v430, %v431
        %v433 = vand.u32 %v432, 4294901760
        %434 = vmatpush1.msra.mxu0 %v433
        %435 = vmatprep.subr.mxu0 0.0
        %v436 = vand.u32 %v216, 4294901760
        %v437 = vsub.f32 %v216, %v436
        %v438 = vand.u32 %v437, 4294901760
        %v439 = vsub.f32 %v437, %v438
        %v440 = vand.u32 %v439, 4294901760
        %441 = vmatpush1.msra.mxu0 %v440
        %442 = vmatprep.subr.mxu0 0.0
        %v443 = vand.u32 %v215, 4294901760
        %v444 = vsub.f32 %v215, %v443
        %v445 = vand.u32 %v444, 4294901760
        %v446 = vsub.f32 %v444, %v445
        %v447 = vand.u32 %v446, 4294901760
        %448 = vmatpush1.msra.mxu0 %v447
        %449 = vmatprep.subr.mxu0 0.0
        %v450 = vand.u32 %v214, 4294901760
        %v451 = vsub.f32 %v214, %v450
        %v452 = vand.u32 %v451, 4294901760
        %v453 = vsub.f32 %v451, %v452
        %v454 = vand.u32 %v453, 4294901760
        %455 = vmatpush1.msra.mxu0 %v454
        %456 = vmatprep.subr.mxu0 0.0
        %v457 = vand.u32 %v213, 4294901760
        %v458 = vsub.f32 %v213, %v457
        %v459 = vand.u32 %v458, 4294901760
        %v460 = vsub.f32 %v458, %v459
        %v461 = vand.u32 %v460, 4294901760
        %462 = vmatpush1.msra.mxu0 %v461
        %463 = vmatprep.subr.mxu0 0.0
        %v464 = vand.u32 %v212, 4294901760
        %v465 = vsub.f32 %v212, %v464
        %v466 = vand.u32 %v465, 4294901760
        %v467 = vsub.f32 %v465, %v466
        %v468 = vand.u32 %v467, 4294901760
        %469 = vmatpush1.msra.mxu0 %v468
        %470 = vmatprep.subr.mxu0 0.0
        %471 = vmatpush2.msra.mxu0 0.0
        %472 = vmatprep.subr.mxu0 0.0
        %473 = vmatpush2.msra.mxu0 0.0
        %474 = vmatprep.subr.mxu0 0.0
        %475 = vmatpush2.msra.mxu0 0.0
        %476 = vmatprep.subr.mxu0 0.0
        %477 = vmatpush2.msra.mxu0 0.0
        %478 = vmatprep.subr.mxu0 0.0
        %479 = vmatpush2.msra.mxu0 0.0
        %480 = vmatprep.subr.mxu0 0.0
        %481 = vmatpush2.msra.mxu0 0.0
        %482 = vmatprep.subr.mxu0 0.0
        %483 = vmatpush2.msra.mxu0 0.0
        %484 = vmatprep.subr.mxu0 0.0
        %485 = vmatpush2.msra.mxu0 0.0
        %486 = vmatprep.subr.mxu0 0.0
        %487 = vmatpush2.msra.mxu0 0.0
        %488 = vmatprep.subr.mxu0 0.0
        %489 = vmatpush2.msra.mxu0 0.0
        %490 = vmatprep.subr.mxu0 0.0
        %491 = vmatpush2.msra.mxu0 0.0
        %492 = vmatprep.subr.mxu0 0.0
        %493 = vmatpush2.msra.mxu0 0.0
        %494 = vmatprep.subr.mxu0 0.0
        %495 = vmatpush2.msra.mxu0 0.0
        %496 = vmatprep.subr.mxu0 0.0
        %497 = vmatpush2.msra.mxu0 0.0
        %498 = vmatprep.subr.mxu0 0.0
        %499 = vmatpush2.msra.mxu0 0.0
        %500 = vmatprep.subr.mxu0 0.0
        %501 = vmatpush2.msra.mxu0 0.0
        %502 = vmatprep.mubr.f32.mxu0 0.0
        %v503 = vand.u32 %v266, 4294901760
        %504 = vmatmul.mubr.f32.gmra.mxu0 %v503
        %v505 = vpop.f32.mrf.mxu0
        %v506 = vadd.f32 %v355, %v505
        %v507 = vpop.f32.mrf.mxu0
        %508 = vdwg.mxu0
        %509 = vmatprep.subr.mxu0 0.0
        %v510 = vand.u32 %v227, 4294901760
        %v511 = vsub.f32 %v227, %v510
        %512 = vmatpush1.msra.mxu0 %v511
        %513 = vmatprep.subr.mxu0 0.0
        %v514 = vand.u32 %v226, 4294901760
        %v515 = vsub.f32 %v226, %v514
        %516 = vmatpush1.msra.mxu0 %v515
        %517 = vmatprep.subr.mxu0 0.0
        %v518 = vand.u32 %v225, 4294901760
        %v519 = vsub.f32 %v225, %v518
        %520 = vmatpush1.msra.mxu0 %v519
        %521 = vmatprep.subr.mxu0 0.0
        %v522 = vand.u32 %v224, 4294901760
        %v523 = vsub.f32 %v224, %v522
        %524 = vmatpush1.msra.mxu0 %v523
        %525 = vmatprep.subr.mxu0 0.0
        %v526 = vand.u32 %v223, 4294901760
        %v527 = vsub.f32 %v223, %v526
        %528 = vmatpush1.msra.mxu0 %v527
        %529 = vmatprep.subr.mxu0 0.0
        %v530 = vand.u32 %v222, 4294901760
        %v531 = vsub.f32 %v222, %v530
        %532 = vmatpush1.msra.mxu0 %v531
        %533 = vmatprep.subr.mxu0 0.0
        %v534 = vand.u32 %v221, 4294901760
        %v535 = vsub.f32 %v221, %v534
        %536 = vmatpush1.msra.mxu0 %v535
        %537 = vmatprep.subr.mxu0 0.0
        %v538 = vand.u32 %v220, 4294901760
        %v539 = vsub.f32 %v220, %v538
        %540 = vmatpush1.msra.mxu0 %v539
        %541 = vmatprep.subr.mxu0 0.0
        %v542 = vand.u32 %v219, 4294901760
        %v543 = vsub.f32 %v219, %v542
        %544 = vmatpush1.msra.mxu0 %v543
        %545 = vmatprep.subr.mxu0 0.0
        %v546 = vand.u32 %v218, 4294901760
        %v547 = vsub.f32 %v218, %v546
        %548 = vmatpush1.msra.mxu0 %v547
        %549 = vmatprep.subr.mxu0 0.0
        %v550 = vand.u32 %v217, 4294901760
        %v551 = vsub.f32 %v217, %v550
        %552 = vmatpush1.msra.mxu0 %v551
        %553 = vmatprep.subr.mxu0 0.0
        %v554 = vand.u32 %v216, 4294901760
        %v555 = vsub.f32 %v216, %v554
        %556 = vmatpush1.msra.mxu0 %v555
        %557 = vmatprep.subr.mxu0 0.0
        %v558 = vand.u32 %v215, 4294901760
        %v559 = vsub.f32 %v215, %v558
        %560 = vmatpush1.msra.mxu0 %v559
        %561 = vmatprep.subr.mxu0 0.0
        %v562 = vand.u32 %v214, 4294901760
        %v563 = vsub.f32 %v214, %v562
        %564 = vmatpush1.msra.mxu0 %v563
        %565 = vmatprep.subr.mxu0 0.0
        %v566 = vand.u32 %v213, 4294901760
        %v567 = vsub.f32 %v213, %v566
        %568 = vmatpush1.msra.mxu0 %v567
        %569 = vmatprep.subr.mxu0 0.0
        %v570 = vand.u32 %v212, 4294901760
        %v571 = vsub.f32 %v212, %v570
        %572 = vmatpush1.msra.mxu0 %v571
        %573 = vmatprep.subr.mxu0 0.0
        %574 = vmatpush2.msra.mxu0 0.0
        %575 = vmatprep.subr.mxu0 0.0
        %576 = vmatpush2.msra.mxu0 0.0
        %577 = vmatprep.subr.mxu0 0.0
        %578 = vmatpush2.msra.mxu0 0.0
        %579 = vmatprep.subr.mxu0 0.0
        %580 = vmatpush2.msra.mxu0 0.0
        %581 = vmatprep.subr.mxu0 0.0
        %582 = vmatpush2.msra.mxu0 0.0
        %583 = vmatprep.subr.mxu0 0.0
        %584 = vmatpush2.msra.mxu0 0.0
        %585 = vmatprep.subr.mxu0 0.0
        %586 = vmatpush2.msra.mxu0 0.0
        %587 = vmatprep.subr.mxu0 0.0
        %588 = vmatpush2.msra.mxu0 0.0
        %589 = vmatprep.subr.mxu0 0.0
        %590 = vmatpush2.msra.mxu0 0.0
        %591 = vmatprep.subr.mxu0 0.0
        %592 = vmatpush2.msra.mxu0 0.0
        %593 = vmatprep.subr.mxu0 0.0
        %594 = vmatpush2.msra.mxu0 0.0
        %595 = vmatprep.subr.mxu0 0.0
        %596 = vmatpush2.msra.mxu0 0.0
        %597 = vmatprep.subr.mxu0 0.0
        %598 = vmatpush2.msra.mxu0 0.0
        %599 = vmatprep.subr.mxu0 0.0
        %600 = vmatpush2.msra.mxu0 0.0
        %601 = vmatprep.subr.mxu0 0.0
        %602 = vmatpush2.msra.mxu0 0.0
        %603 = vmatprep.subr.mxu0 0.0
        %604 = vmatpush2.msra.mxu0 0.0
        %605 = vmatprep.mubr.f32.mxu0 0.0
        %v606 = vand.u32 %v266, 4294901760
        %v607 = vsub.f32 %v266, %v606
        %608 = vmatmul.mubr.f32.gmra.mxu0 %v607
        %v609 = vpop.f32.mrf.mxu0
        %v610 = vadd.f32 %v506, %v609
        %v611 = vpop.f32.mrf.mxu0
        %612 = vdwg.mxu0
        %613 = vmatprep.subr.mxu0 0.0
        %v614 = vand.u32 %v227, 4294901760
        %615 = vmatpush1.msra.mxu0 %v614
        %616 = vmatprep.subr.mxu0 0.0
        %v617 = vand.u32 %v226, 4294901760
        %618 = vmatpush1.msra.mxu0 %v617
        %619 = vmatprep.subr.mxu0 0.0
        %v620 = vand.u32 %v225, 4294901760
        %621 = vmatpush1.msra.mxu0 %v620
        %622 = vmatprep.subr.mxu0 0.0
        %v623 = vand.u32 %v224, 4294901760
        %624 = vmatpush1.msra.mxu0 %v623
        %625 = vmatprep.subr.mxu0 0.0
        %v626 = vand.u32 %v223, 4294901760
        %627 = vmatpush1.msra.mxu0 %v626
        %628 = vmatprep.subr.mxu0 0.0
        %v629 = vand.u32 %v222, 4294901760
        %630 = vmatpush1.msra.mxu0 %v629
        %631 = vmatprep.subr.mxu0 0.0
        %v632 = vand.u32 %v221, 4294901760
        %633 = vmatpush1.msra.mxu0 %v632
        %634 = vmatprep.subr.mxu0 0.0
        %v635 = vand.u32 %v220, 4294901760
        %636 = vmatpush1.msra.mxu0 %v635
        %637 = vmatprep.subr.mxu0 0.0
        %v638 = vand.u32 %v219, 4294901760
        %639 = vmatpush1.msra.mxu0 %v638
        %640 = vmatprep.subr.mxu0 0.0
        %v641 = vand.u32 %v218, 4294901760
        %642 = vmatpush1.msra.mxu0 %v641
        %643 = vmatprep.subr.mxu0 0.0
        %v644 = vand.u32 %v217, 4294901760
        %645 = vmatpush1.msra.mxu0 %v644
        %646 = vmatprep.subr.mxu0 0.0
        %v647 = vand.u32 %v216, 4294901760
        %648 = vmatpush1.msra.mxu0 %v647
        %649 = vmatprep.subr.mxu0 0.0
        %v650 = vand.u32 %v215, 4294901760
        %651 = vmatpush1.msra.mxu0 %v650
        %652 = vmatprep.subr.mxu0 0.0
        %v653 = vand.u32 %v214, 4294901760
        %654 = vmatpush1.msra.mxu0 %v653
        %655 = vmatprep.subr.mxu0 0.0
        %v656 = vand.u32 %v213, 4294901760
        %657 = vmatpush1.msra.mxu0 %v656
        %658 = vmatprep.subr.mxu0 0.0
        %v659 = vand.u32 %v212, 4294901760
        %660 = vmatpush1.msra.mxu0 %v659
        %661 = vmatprep.subr.mxu0 0.0
        %662 = vmatpush2.msra.mxu0 0.0
        %663 = vmatprep.subr.mxu0 0.0
        %664 = vmatpush2.msra.mxu0 0.0
        %665 = vmatprep.subr.mxu0 0.0
        %666 = vmatpush2.msra.mxu0 0.0
        %667 = vmatprep.subr.mxu0 0.0
        %668 = vmatpush2.msra.mxu0 0.0
        %669 = vmatprep.subr.mxu0 0.0
        %670 = vmatpush2.msra.mxu0 0.0
        %671 = vmatprep.subr.mxu0 0.0
        %672 = vmatpush2.msra.mxu0 0.0
        %673 = vmatprep.subr.mxu0 0.0
        %674 = vmatpush2.msra.mxu0 0.0
        %675 = vmatprep.subr.mxu0 0.0
        %676 = vmatpush2.msra.mxu0 0.0
        %677 = vmatprep.subr.mxu0 0.0
        %678 = vmatpush2.msra.mxu0 0.0
        %679 = vmatprep.subr.mxu0 0.0
        %680 = vmatpush2.msra.mxu0 0.0
        %681 = vmatprep.subr.mxu0 0.0
        %682 = vmatpush2.msra.mxu0 0.0
        %683 = vmatprep.subr.mxu0 0.0
        %684 = vmatpush2.msra.mxu0 0.0
        %685 = vmatprep.subr.mxu0 0.0
        %686 = vmatpush2.msra.mxu0 0.0
        %687 = vmatprep.subr.mxu0 0.0
        %688 = vmatpush2.msra.mxu0 0.0
        %689 = vmatprep.subr.mxu0 0.0
        %690 = vmatpush2.msra.mxu0 0.0
        %691 = vmatprep.subr.mxu0 0.0
        %692 = vmatpush2.msra.mxu0 0.0
        %693 = vmatprep.mubr.f32.mxu0 0.0
        %v694 = vand.u32 %v266, 4294901760
        %v695 = vsub.f32 %v266, %v694
        %v696 = vand.u32 %v695, 4294901760
        %697 = vmatmul.mubr.f32.gmra.mxu0 %v696
        %v698 = vpop.f32.mrf.mxu0
        %v699 = vadd.f32 %v610, %v698
        %v700 = vpop.f32.mrf.mxu0
        %701 = vdwg.mxu0
        %702 = vmatprep.subr.mxu0 0.0
        %v703 = vand.u32 %v227, 4294901760
        %v704 = vsub.f32 %v227, %v703
        %v705 = vand.u32 %v704, 4294901760
        %706 = vmatpush1.msra.mxu0 %v705
        %707 = vmatprep.subr.mxu0 0.0
        %v708 = vand.u32 %v226, 4294901760
        %v709 = vsub.f32 %v226, %v708
        %v710 = vand.u32 %v709, 4294901760
        %711 = vmatpush1.msra.mxu0 %v710
        %712 = vmatprep.subr.mxu0 0.0
        %v713 = vand.u32 %v225, 4294901760
        %v714 = vsub.f32 %v225, %v713
        %v715 = vand.u32 %v714, 4294901760
        %716 = vmatpush1.msra.mxu0 %v715
        %717 = vmatprep.subr.mxu0 0.0
        %v718 = vand.u32 %v224, 4294901760
        %v719 = vsub.f32 %v224, %v718
        %v720 = vand.u32 %v719, 4294901760
        %721 = vmatpush1.msra.mxu0 %v720
        %722 = vmatprep.subr.mxu0 0.0
        %v723 = vand.u32 %v223, 4294901760
        %v724 = vsub.f32 %v223, %v723
        %v725 = vand.u32 %v724, 4294901760
        %726 = vmatpush1.msra.mxu0 %v725
        %727 = vmatprep.subr.mxu0 0.0
        %v728 = vand.u32 %v222, 4294901760
        %v729 = vsub.f32 %v222, %v728
        %v730 = vand.u32 %v729, 4294901760
        %731 = vmatpush1.msra.mxu0 %v730
        %732 = vmatprep.subr.mxu0 0.0
        %v733 = vand.u32 %v221, 4294901760
        %v734 = vsub.f32 %v221, %v733
        %v735 = vand.u32 %v734, 4294901760
        %736 = vmatpush1.msra.mxu0 %v735
        %737 = vmatprep.subr.mxu0 0.0
        %v738 = vand.u32 %v220, 4294901760
        %v739 = vsub.f32 %v220, %v738
        %v740 = vand.u32 %v739, 4294901760
        %741 = vmatpush1.msra.mxu0 %v740
        %742 = vmatprep.subr.mxu0 0.0
        %v743 = vand.u32 %v219, 4294901760
        %v744 = vsub.f32 %v219, %v743
        %v745 = vand.u32 %v744, 4294901760
        %746 = vmatpush1.msra.mxu0 %v745
        %747 = vmatprep.subr.mxu0 0.0
        %v748 = vand.u32 %v218, 4294901760
        %v749 = vsub.f32 %v218, %v748
        %v750 = vand.u32 %v749, 4294901760
        %751 = vmatpush1.msra.mxu0 %v750
        %752 = vmatprep.subr.mxu0 0.0
        %v753 = vand.u32 %v217, 4294901760
        %v754 = vsub.f32 %v217, %v753
        %v755 = vand.u32 %v754, 4294901760
        %756 = vmatpush1.msra.mxu0 %v755
        %757 = vmatprep.subr.mxu0 0.0
        %v758 = vand.u32 %v216, 4294901760
        %v759 = vsub.f32 %v216, %v758
        %v760 = vand.u32 %v759, 4294901760
        %761 = vmatpush1.msra.mxu0 %v760
        %762 = vmatprep.subr.mxu0 0.0
        %v763 = vand.u32 %v215, 4294901760
        %v764 = vsub.f32 %v215, %v763
        %v765 = vand.u32 %v764, 4294901760
        %766 = vmatpush1.msra.mxu0 %v765
        %767 = vmatprep.subr.mxu0 0.0
        %v768 = vand.u32 %v214, 4294901760
        %v769 = vsub.f32 %v214, %v768
        %v770 = vand.u32 %v769, 4294901760
        %771 = vmatpush1.msra.mxu0 %v770
        %772 = vmatprep.subr.mxu0 0.0
        %v773 = vand.u32 %v213, 4294901760
        %v774 = vsub.f32 %v213, %v773
        %v775 = vand.u32 %v774, 4294901760
        %776 = vmatpush1.msra.mxu0 %v775
        %777 = vmatprep.subr.mxu0 0.0
        %v778 = vand.u32 %v212, 4294901760
        %v779 = vsub.f32 %v212, %v778
        %v780 = vand.u32 %v779, 4294901760
        %781 = vmatpush1.msra.mxu0 %v780
        %782 = vmatprep.subr.mxu0 0.0
        %783 = vmatpush2.msra.mxu0 0.0
        %784 = vmatprep.subr.mxu0 0.0
        %785 = vmatpush2.msra.mxu0 0.0
        %786 = vmatprep.subr.mxu0 0.0
        %787 = vmatpush2.msra.mxu0 0.0
        %788 = vmatprep.subr.mxu0 0.0
        %789 = vmatpush2.msra.mxu0 0.0
        %790 = vmatprep.subr.mxu0 0.0
        %791 = vmatpush2.msra.mxu0 0.0
        %792 = vmatprep.subr.mxu0 0.0
        %793 = vmatpush2.msra.mxu0 0.0
        %794 = vmatprep.subr.mxu0 0.0
        %795 = vmatpush2.msra.mxu0 0.0
        %796 = vmatprep.subr.mxu0 0.0
        %797 = vmatpush2.msra.mxu0 0.0
        %798 = vmatprep.subr.mxu0 0.0
        %799 = vmatpush2.msra.mxu0 0.0
        %800 = vmatprep.subr.mxu0 0.0
        %801 = vmatpush2.msra.mxu0 0.0
        %802 = vmatprep.subr.mxu0 0.0
        %803 = vmatpush2.msra.mxu0 0.0
        %804 = vmatprep.subr.mxu0 0.0
        %805 = vmatpush2.msra.mxu0 0.0
        %806 = vmatprep.subr.mxu0 0.0
        %807 = vmatpush2.msra.mxu0 0.0
        %808 = vmatprep.subr.mxu0 0.0
        %809 = vmatpush2.msra.mxu0 0.0
        %810 = vmatprep.subr.mxu0 0.0
        %811 = vmatpush2.msra.mxu0 0.0
        %812 = vmatprep.subr.mxu0 0.0
        %813 = vmatpush2.msra.mxu0 0.0
        %814 = vmatprep.mubr.f32.mxu0 0.0
        %v815 = vand.u32 %v266, 4294901760
        %816 = vmatmul.mubr.f32.gmra.mxu0 %v815
        %v817 = vpop.f32.mrf.mxu0
        %v818 = vadd.f32 %v699, %v817
        %v819 = vpop.f32.mrf.mxu0
        %820 = vdwg.mxu0
        %821 = vmatprep.subr.mxu0 0.0
        %v822 = vand.u32 %v227, 4294901760
        %823 = vmatpush1.msra.mxu0 %v822
        %824 = vmatprep.subr.mxu0 0.0
        %v825 = vand.u32 %v226, 4294901760
        %826 = vmatpush1.msra.mxu0 %v825
        %827 = vmatprep.subr.mxu0 0.0
        %v828 = vand.u32 %v225, 4294901760
        %829 = vmatpush1.msra.mxu0 %v828
        %830 = vmatprep.subr.mxu0 0.0
        %v831 = vand.u32 %v224, 4294901760
        %832 = vmatpush1.msra.mxu0 %v831
        %833 = vmatprep.subr.mxu0 0.0
        %v834 = vand.u32 %v223, 4294901760
        %835 = vmatpush1.msra.mxu0 %v834
        %836 = vmatprep.subr.mxu0 0.0
        %v837 = vand.u32 %v222, 4294901760
        %838 = vmatpush1.msra.mxu0 %v837
        %839 = vmatprep.subr.mxu0 0.0
        %v840 = vand.u32 %v221, 4294901760
        %841 = vmatpush1.msra.mxu0 %v840
        %842 = vmatprep.subr.mxu0 0.0
        %v843 = vand.u32 %v220, 4294901760
        %844 = vmatpush1.msra.mxu0 %v843
        %845 = vmatprep.subr.mxu0 0.0
        %v846 = vand.u32 %v219, 4294901760
        %847 = vmatpush1.msra.mxu0 %v846
        %848 = vmatprep.subr.mxu0 0.0
        %v849 = vand.u32 %v218, 4294901760
        %850 = vmatpush1.msra.mxu0 %v849
        %851 = vmatprep.subr.mxu0 0.0
        %v852 = vand.u32 %v217, 4294901760
        %853 = vmatpush1.msra.mxu0 %v852
        %854 = vmatprep.subr.mxu0 0.0
        %v855 = vand.u32 %v216, 4294901760
        %856 = vmatpush1.msra.mxu0 %v855
        %857 = vmatprep.subr.mxu0 0.0
        %v858 = vand.u32 %v215, 4294901760
        %859 = vmatpush1.msra.mxu0 %v858
        %860 = vmatprep.subr.mxu0 0.0
        %v861 = vand.u32 %v214, 4294901760
        %862 = vmatpush1.msra.mxu0 %v861
        %863 = vmatprep.subr.mxu0 0.0
        %v864 = vand.u32 %v213, 4294901760
        %865 = vmatpush1.msra.mxu0 %v864
        %866 = vmatprep.subr.mxu0 0.0
        %v867 = vand.u32 %v212, 4294901760
        %868 = vmatpush1.msra.mxu0 %v867
        %869 = vmatprep.subr.mxu0 0.0
        %870 = vmatpush2.msra.mxu0 0.0
        %871 = vmatprep.subr.mxu0 0.0
        %872 = vmatpush2.msra.mxu0 0.0
        %873 = vmatprep.subr.mxu0 0.0
        %874 = vmatpush2.msra.mxu0 0.0
        %875 = vmatprep.subr.mxu0 0.0
        %876 = vmatpush2.msra.mxu0 0.0
        %877 = vmatprep.subr.mxu0 0.0
        %878 = vmatpush2.msra.mxu0 0.0
        %879 = vmatprep.subr.mxu0 0.0
        %880 = vmatpush2.msra.mxu0 0.0
        %881 = vmatprep.subr.mxu0 0.0
        %882 = vmatpush2.msra.mxu0 0.0
        %883 = vmatprep.subr.mxu0 0.0
        %884 = vmatpush2.msra.mxu0 0.0
        %885 = vmatprep.subr.mxu0 0.0
        %886 = vmatpush2.msra.mxu0 0.0
        %887 = vmatprep.subr.mxu0 0.0
        %888 = vmatpush2.msra.mxu0 0.0
        %889 = vmatprep.subr.mxu0 0.0
        %890 = vmatpush2.msra.mxu0 0.0
        %891 = vmatprep.subr.mxu0 0.0
        %892 = vmatpush2.msra.mxu0 0.0
        %893 = vmatprep.subr.mxu0 0.0
        %894 = vmatpush2.msra.mxu0 0.0
        %895 = vmatprep.subr.mxu0 0.0
        %896 = vmatpush2.msra.mxu0 0.0
        %897 = vmatprep.subr.mxu0 0.0
        %898 = vmatpush2.msra.mxu0 0.0
        %899 = vmatprep.subr.mxu0 0.0
        %900 = vmatpush2.msra.mxu0 0.0
        %901 = vmatprep.mubr.f32.mxu0 0.0
        %v902 = vand.u32 %v266, 4294901760
        %903 = vmatmul.mubr.f32.gmra.mxu0 %v902
        %v904 = vpop.f32.mrf.mxu0
        %v905 = vadd.f32 %v818, %v904
        %v906 = vpop.f32.mrf.mxu0
        %907 = vdwg.mxu0
        %vm908 = vcmask 97280
        %v910 = vsel %vm908, %v245, 0
        %vm912 = vcmask 1043456
        %v914 = vsel %vm912, %v211, 0
        %916 = vmatprep.subr.mxu0 0.0
        %917 = vmatpush1.msra.mxu0 0.0
        %918 = vmatprep.subr.mxu0 0.0
        %919 = vmatpush1.msra.mxu0 0.0
        %920 = vmatprep.subr.mxu0 0.0
        %921 = vmatpush1.msra.mxu0 0.0
        %922 = vmatprep.subr.mxu0 0.0
        %923 = vmatpush1.msra.mxu0 0.0
        %924 = vmatprep.subr.mxu0 0.0
        %925 = vmatpush1.msra.mxu0 0.0
        %926 = vmatprep.subr.mxu0 0.0
        %927 = vmatpush1.msra.mxu0 0.0
        %928 = vmatprep.subr.mxu0 0.0
        %929 = vmatpush1.msra.mxu0 0.0
        %930 = vmatprep.subr.mxu0 0.0
        %931 = vmatpush1.msra.mxu0 0.0
        %932 = vmatprep.subr.mxu0 0.0
        %933 = vmatpush1.msra.mxu0 0.0
        %934 = vmatprep.subr.mxu0 0.0
        %935 = vmatpush1.msra.mxu0 0.0
        %936 = vmatprep.subr.mxu0 0.0
        %937 = vmatpush1.msra.mxu0 0.0
        %938 = vmatprep.subr.mxu0 0.0
        %939 = vmatpush1.msra.mxu0 0.0
        %940 = vmatprep.subr.mxu0 0.0
        %941 = vmatpush1.msra.mxu0 0.0
        %942 = vmatprep.subr.mxu0 0.0
        %943 = vmatpush1.msra.mxu0 0.0
        %944 = vmatprep.subr.mxu0 0.0
        %v945 = vand.u32 %v914, 4294901760
        %946 = vmatpush1.msra.mxu0 %v945
        %947 = vmatprep.subr.mxu0 0.0
        %v948 = vand.u32 %v210, 4294901760
        %949 = vmatpush1.msra.mxu0 %v948
        %950 = vmatprep.subr.mxu0 0.0
        %951 = vmatpush2.msra.mxu0 0.0
        %952 = vmatprep.subr.mxu0 0.0
        %953 = vmatpush2.msra.mxu0 0.0
        %954 = vmatprep.subr.mxu0 0.0
        %955 = vmatpush2.msra.mxu0 0.0
        %956 = vmatprep.subr.mxu0 0.0
        %957 = vmatpush2.msra.mxu0 0.0
        %958 = vmatprep.subr.mxu0 0.0
        %959 = vmatpush2.msra.mxu0 0.0
        %960 = vmatprep.subr.mxu0 0.0
        %961 = vmatpush2.msra.mxu0 0.0
        %962 = vmatprep.subr.mxu0 0.0
        %963 = vmatpush2.msra.mxu0 0.0
        %964 = vmatprep.subr.mxu0 0.0
        %965 = vmatpush2.msra.mxu0 0.0
        %966 = vmatprep.subr.mxu0 0.0
        %967 = vmatpush2.msra.mxu0 0.0
        %968 = vmatprep.subr.mxu0 0.0
        %969 = vmatpush2.msra.mxu0 0.0
        %970 = vmatprep.subr.mxu0 0.0
        %971 = vmatpush2.msra.mxu0 0.0
        %972 = vmatprep.subr.mxu0 0.0
        %973 = vmatpush2.msra.mxu0 0.0
        %974 = vmatprep.subr.mxu0 0.0
        %975 = vmatpush2.msra.mxu0 0.0
        %976 = vmatprep.subr.mxu0 0.0
        %977 = vmatpush2.msra.mxu0 0.0
        %978 = vmatprep.subr.mxu0 0.0
        %979 = vmatpush2.msra.mxu0 0.0
        %980 = vmatprep.subr.mxu0 0.0
        %981 = vmatpush2.msra.mxu0 0.0
        %982 = vmatprep.mubr.f32.mxu0 0.0
        %v983 = vand.u32 %v910, 4294901760
        %v984 = vsub.f32 %v910, %v983
        %v985 = vand.u32 %v984, 4294901760
        %v986 = vsub.f32 %v984, %v985
        %v987 = vand.u32 %v986, 4294901760
        %988 = vmatmul.mubr.f32.gmra.mxu0 %v987
        %v989 = vpop.f32.mrf.mxu0
        %v990 = vadd.f32 %v905, %v989
        %v991 = vpop.f32.mrf.mxu0
        %992 = vdwg.mxu0
        %993 = vmatprep.subr.mxu0 0.0
        %994 = vmatpush1.msra.mxu0 0.0
        %995 = vmatprep.subr.mxu0 0.0
        %996 = vmatpush1.msra.mxu0 0.0
        %997 = vmatprep.subr.mxu0 0.0
        %998 = vmatpush1.msra.mxu0 0.0
        %999 = vmatprep.subr.mxu0 0.0
        %1000 = vmatpush1.msra.mxu0 0.0
        %1001 = vmatprep.subr.mxu0 0.0
        %1002 = vmatpush1.msra.mxu0 0.0
        %1003 = vmatprep.subr.mxu0 0.0
        %1004 = vmatpush1.msra.mxu0 0.0
        %1005 = vmatprep.subr.mxu0 0.0
        %1006 = vmatpush1.msra.mxu0 0.0
        %1007 = vmatprep.subr.mxu0 0.0
        %1008 = vmatpush1.msra.mxu0 0.0
        %1009 = vmatprep.subr.mxu0 0.0
        %1010 = vmatpush1.msra.mxu0 0.0
        %1011 = vmatprep.subr.mxu0 0.0
        %1012 = vmatpush1.msra.mxu0 0.0
        %1013 = vmatprep.subr.mxu0 0.0
        %1014 = vmatpush1.msra.mxu0 0.0
        %1015 = vmatprep.subr.mxu0 0.0
        %1016 = vmatpush1.msra.mxu0 0.0
        %1017 = vmatprep.subr.mxu0 0.0
        %1018 = vmatpush1.msra.mxu0 0.0
        %1019 = vmatprep.subr.mxu0 0.0
        %1020 = vmatpush1.msra.mxu0 0.0
        %1021 = vmatprep.subr.mxu0 0.0
        %v1022 = vand.u32 %v914, 4294901760
        %v1023 = vsub.f32 %v914, %v1022
        %v1024 = vand.u32 %v1023, 4294901760
        %v1025 = vsub.f32 %v1023, %v1024
        %v1026 = vand.u32 %v1025, 4294901760
        %1027 = vmatpush1.msra.mxu0 %v1026
        %1028 = vmatprep.subr.mxu0 0.0
        %v1029 = vand.u32 %v210, 4294901760
        %v1030 = vsub.f32 %v210, %v1029
        %v1031 = vand.u32 %v1030, 4294901760
        %v1032 = vsub.f32 %v1030, %v1031
        %v1033 = vand.u32 %v1032, 4294901760
        %1034 = vmatpush1.msra.mxu0 %v1033
        %1035 = vmatprep.subr.mxu0 0.0
        %1036 = vmatpush2.msra.mxu0 0.0
        %1037 = vmatprep.subr.mxu0 0.0
        %1038 = vmatpush2.msra.mxu0 0.0
        %1039 = vmatprep.subr.mxu0 0.0
        %1040 = vmatpush2.msra.mxu0 0.0
        %1041 = vmatprep.subr.mxu0 0.0
        %1042 = vmatpush2.msra.mxu0 0.0
        %1043 = vmatprep.subr.mxu0 0.0
        %1044 = vmatpush2.msra.mxu0 0.0
        %1045 = vmatprep.subr.mxu0 0.0
        %1046 = vmatpush2.msra.mxu0 0.0
        %1047 = vmatprep.subr.mxu0 0.0
        %1048 = vmatpush2.msra.mxu0 0.0
        %1049 = vmatprep.subr.mxu0 0.0
        %1050 = vmatpush2.msra.mxu0 0.0
        %1051 = vmatprep.subr.mxu0 0.0
        %1052 = vmatpush2.msra.mxu0 0.0
        %1053 = vmatprep.subr.mxu0 0.0
        %1054 = vmatpush2.msra.mxu0 0.0
        %1055 = vmatprep.subr.mxu0 0.0
        %1056 = vmatpush2.msra.mxu0 0.0
        %1057 = vmatprep.subr.mxu0 0.0
        %1058 = vmatpush2.msra.mxu0 0.0
        %1059 = vmatprep.subr.mxu0 0.0
        %1060 = vmatpush2.msra.mxu0 0.0
        %1061 = vmatprep.subr.mxu0 0.0
        %1062 = vmatpush2.msra.mxu0 0.0
        %1063 = vmatprep.subr.mxu0 0.0
        %1064 = vmatpush2.msra.mxu0 0.0
        %1065 = vmatprep.subr.mxu0 0.0
        %1066 = vmatpush2.msra.mxu0 0.0
        %1067 = vmatprep.mubr.f32.mxu0 0.0
        %v1068 = vand.u32 %v910, 4294901760
        %1069 = vmatmul.mubr.f32.gmra.mxu0 %v1068
        %v1070 = vpop.f32.mrf.mxu0
        %v1071 = vadd.f32 %v990, %v1070
        %v1072 = vpop.f32.mrf.mxu0
        %1073 = vdwg.mxu0
        %1074 = vmatprep.subr.mxu0 0.0
        %1075 = vmatpush1.msra.mxu0 0.0
        %1076 = vmatprep.subr.mxu0 0.0
        %1077 = vmatpush1.msra.mxu0 0.0
        %1078 = vmatprep.subr.mxu0 0.0
        %1079 = vmatpush1.msra.mxu0 0.0
        %1080 = vmatprep.subr.mxu0 0.0
        %1081 = vmatpush1.msra.mxu0 0.0
        %1082 = vmatprep.subr.mxu0 0.0
        %1083 = vmatpush1.msra.mxu0 0.0
        %1084 = vmatprep.subr.mxu0 0.0
        %1085 = vmatpush1.msra.mxu0 0.0
        %1086 = vmatprep.subr.mxu0 0.0
        %1087 = vmatpush1.msra.mxu0 0.0
        %1088 = vmatprep.subr.mxu0 0.0
        %1089 = vmatpush1.msra.mxu0 0.0
        %1090 = vmatprep.subr.mxu0 0.0
        %1091 = vmatpush1.msra.mxu0 0.0
        %1092 = vmatprep.subr.mxu0 0.0
        %1093 = vmatpush1.msra.mxu0 0.0
        %1094 = vmatprep.subr.mxu0 0.0
        %1095 = vmatpush1.msra.mxu0 0.0
        %1096 = vmatprep.subr.mxu0 0.0
        %1097 = vmatpush1.msra.mxu0 0.0
        %1098 = vmatprep.subr.mxu0 0.0
        %1099 = vmatpush1.msra.mxu0 0.0
        %1100 = vmatprep.subr.mxu0 0.0
        %1101 = vmatpush1.msra.mxu0 0.0
        %1102 = vmatprep.subr.mxu0 0.0
        %v1103 = vand.u32 %v914, 4294901760
        %v1104 = vsub.f32 %v914, %v1103
        %1105 = vmatpush1.msra.mxu0 %v1104
        %1106 = vmatprep.subr.mxu0 0.0
        %v1107 = vand.u32 %v210, 4294901760
        %v1108 = vsub.f32 %v210, %v1107
        %1109 = vmatpush1.msra.mxu0 %v1108
        %1110 = vmatprep.subr.mxu0 0.0
        %1111 = vmatpush2.msra.mxu0 0.0
        %1112 = vmatprep.subr.mxu0 0.0
        %1113 = vmatpush2.msra.mxu0 0.0
        %1114 = vmatprep.subr.mxu0 0.0
        %1115 = vmatpush2.msra.mxu0 0.0
        %1116 = vmatprep.subr.mxu0 0.0
        %1117 = vmatpush2.msra.mxu0 0.0
        %1118 = vmatprep.subr.mxu0 0.0
        %1119 = vmatpush2.msra.mxu0 0.0
        %1120 = vmatprep.subr.mxu0 0.0
        %1121 = vmatpush2.msra.mxu0 0.0
        %1122 = vmatprep.subr.mxu0 0.0
        %1123 = vmatpush2.msra.mxu0 0.0
        %1124 = vmatprep.subr.mxu0 0.0
        %1125 = vmatpush2.msra.mxu0 0.0
        %1126 = vmatprep.subr.mxu0 0.0
        %1127 = vmatpush2.msra.mxu0 0.0
        %1128 = vmatprep.subr.mxu0 0.0
        %1129 = vmatpush2.msra.mxu0 0.0
        %1130 = vmatprep.subr.mxu0 0.0
        %1131 = vmatpush2.msra.mxu0 0.0
        %1132 = vmatprep.subr.mxu0 0.0
        %1133 = vmatpush2.msra.mxu0 0.0
        %1134 = vmatprep.subr.mxu0 0.0
        %1135 = vmatpush2.msra.mxu0 0.0
        %1136 = vmatprep.subr.mxu0 0.0
        %1137 = vmatpush2.msra.mxu0 0.0
        %1138 = vmatprep.subr.mxu0 0.0
        %1139 = vmatpush2.msra.mxu0 0.0
        %1140 = vmatprep.subr.mxu0 0.0
        %1141 = vmatpush2.msra.mxu0 0.0
        %1142 = vmatprep.mubr.f32.mxu0 0.0
        %v1143 = vand.u32 %v910, 4294901760
        %v1144 = vsub.f32 %v910, %v1143
        %1145 = vmatmul.mubr.f32.gmra.mxu0 %v1144
        %v1146 = vpop.f32.mrf.mxu0
        %v1147 = vadd.f32 %v1071, %v1146
        %v1148 = vpop.f32.mrf.mxu0
        %1149 = vdwg.mxu0
        %1150 = vmatprep.subr.mxu0 0.0
        %1151 = vmatpush1.msra.mxu0 0.0
        %1152 = vmatprep.subr.mxu0 0.0
        %1153 = vmatpush1.msra.mxu0 0.0
        %1154 = vmatprep.subr.mxu0 0.0
        %1155 = vmatpush1.msra.mxu0 0.0
        %1156 = vmatprep.subr.mxu0 0.0
        %1157 = vmatpush1.msra.mxu0 0.0
        %1158 = vmatprep.subr.mxu0 0.0
        %1159 = vmatpush1.msra.mxu0 0.0
        %1160 = vmatprep.subr.mxu0 0.0
        %1161 = vmatpush1.msra.mxu0 0.0
        %1162 = vmatprep.subr.mxu0 0.0
        %1163 = vmatpush1.msra.mxu0 0.0
        %1164 = vmatprep.subr.mxu0 0.0
        %1165 = vmatpush1.msra.mxu0 0.0
        %1166 = vmatprep.subr.mxu0 0.0
        %1167 = vmatpush1.msra.mxu0 0.0
        %1168 = vmatprep.subr.mxu0 0.0
        %1169 = vmatpush1.msra.mxu0 0.0
        %1170 = vmatprep.subr.mxu0 0.0
        %1171 = vmatpush1.msra.mxu0 0.0
        %1172 = vmatprep.subr.mxu0 0.0
        %1173 = vmatpush1.msra.mxu0 0.0
        %1174 = vmatprep.subr.mxu0 0.0
        %1175 = vmatpush1.msra.mxu0 0.0
        %1176 = vmatprep.subr.mxu0 0.0
        %1177 = vmatpush1.msra.mxu0 0.0
        %1178 = vmatprep.subr.mxu0 0.0
        %v1179 = vand.u32 %v914, 4294901760
        %1180 = vmatpush1.msra.mxu0 %v1179
        %1181 = vmatprep.subr.mxu0 0.0
        %v1182 = vand.u32 %v210, 4294901760
        %1183 = vmatpush1.msra.mxu0 %v1182
        %1184 = vmatprep.subr.mxu0 0.0
        %1185 = vmatpush2.msra.mxu0 0.0
        %1186 = vmatprep.subr.mxu0 0.0
        %1187 = vmatpush2.msra.mxu0 0.0
        %1188 = vmatprep.subr.mxu0 0.0
        %1189 = vmatpush2.msra.mxu0 0.0
        %1190 = vmatprep.subr.mxu0 0.0
        %1191 = vmatpush2.msra.mxu0 0.0
        %1192 = vmatprep.subr.mxu0 0.0
        %1193 = vmatpush2.msra.mxu0 0.0
        %1194 = vmatprep.subr.mxu0 0.0
        %1195 = vmatpush2.msra.mxu0 0.0
        %1196 = vmatprep.subr.mxu0 0.0
        %1197 = vmatpush2.msra.mxu0 0.0
        %1198 = vmatprep.subr.mxu0 0.0
        %1199 = vmatpush2.msra.mxu0 0.0
        %1200 = vmatprep.subr.mxu0 0.0
        %1201 = vmatpush2.msra.mxu0 0.0
        %1202 = vmatprep.subr.mxu0 0.0
        %1203 = vmatpush2.msra.mxu0 0.0
        %1204 = vmatprep.subr.mxu0 0.0
        %1205 = vmatpush2.msra.mxu0 0.0
        %1206 = vmatprep.subr.mxu0 0.0
        %1207 = vmatpush2.msra.mxu0 0.0
        %1208 = vmatprep.subr.mxu0 0.0
        %1209 = vmatpush2.msra.mxu0 0.0
        %1210 = vmatprep.subr.mxu0 0.0
        %1211 = vmatpush2.msra.mxu0 0.0
        %1212 = vmatprep.subr.mxu0 0.0
        %1213 = vmatpush2.msra.mxu0 0.0
        %1214 = vmatprep.subr.mxu0 0.0
        %1215 = vmatpush2.msra.mxu0 0.0
        %1216 = vmatprep.mubr.f32.mxu0 0.0
        %v1217 = vand.u32 %v910, 4294901760
        %v1218 = vsub.f32 %v910, %v1217
        %v1219 = vand.u32 %v1218, 4294901760
        %1220 = vmatmul.mubr.f32.gmra.mxu0 %v1219
        %v1221 = vpop.f32.mrf.mxu0
        %v1222 = vadd.f32 %v1147, %v1221
        %v1223 = vpop.f32.mrf.mxu0
        %1224 = vdwg.mxu0
        %1225 = vmatprep.subr.mxu0 0.0
        %1226 = vmatpush1.msra.mxu0 0.0
        %1227 = vmatprep.subr.mxu0 0.0
        %1228 = vmatpush1.msra.mxu0 0.0
        %1229 = vmatprep.subr.mxu0 0.0
        %1230 = vmatpush1.msra.mxu0 0.0
        %1231 = vmatprep.subr.mxu0 0.0
        %1232 = vmatpush1.msra.mxu0 0.0
        %1233 = vmatprep.subr.mxu0 0.0
        %1234 = vmatpush1.msra.mxu0 0.0
        %1235 = vmatprep.subr.mxu0 0.0
        %1236 = vmatpush1.msra.mxu0 0.0
        %1237 = vmatprep.subr.mxu0 0.0
        %1238 = vmatpush1.msra.mxu0 0.0
        %1239 = vmatprep.subr.mxu0 0.0
        %1240 = vmatpush1.msra.mxu0 0.0
        %1241 = vmatprep.subr.mxu0 0.0
        %1242 = vmatpush1.msra.mxu0 0.0
        %1243 = vmatprep.subr.mxu0 0.0
        %1244 = vmatpush1.msra.mxu0 0.0
        %1245 = vmatprep.subr.mxu0 0.0
        %1246 = vmatpush1.msra.mxu0 0.0
        %1247 = vmatprep.subr.mxu0 0.0
        %1248 = vmatpush1.msra.mxu0 0.0
        %1249 = vmatprep.subr.mxu0 0.0
        %1250 = vmatpush1.msra.mxu0 0.0
        %1251 = vmatprep.subr.mxu0 0.0
        %1252 = vmatpush1.msra.mxu0 0.0
        %1253 = vmatprep.subr.mxu0 0.0
        %v1254 = vand.u32 %v914, 4294901760
        %v1255 = vsub.f32 %v914, %v1254
        %v1256 = vand.u32 %v1255, 4294901760
        %1257 = vmatpush1.msra.mxu0 %v1256
        %1258 = vmatprep.subr.mxu0 0.0
        %v1259 = vand.u32 %v210, 4294901760
        %v1260 = vsub.f32 %v210, %v1259
        %v1261 = vand.u32 %v1260, 4294901760
        %1262 = vmatpush1.msra.mxu0 %v1261
        %1263 = vmatprep.subr.mxu0 0.0
        %1264 = vmatpush2.msra.mxu0 0.0
        %1265 = vmatprep.subr.mxu0 0.0
        %1266 = vmatpush2.msra.mxu0 0.0
        %1267 = vmatprep.subr.mxu0 0.0
        %1268 = vmatpush2.msra.mxu0 0.0
        %1269 = vmatprep.subr.mxu0 0.0
        %1270 = vmatpush2.msra.mxu0 0.0
        %1271 = vmatprep.subr.mxu0 0.0
        %1272 = vmatpush2.msra.mxu0 0.0
        %1273 = vmatprep.subr.mxu0 0.0
        %1274 = vmatpush2.msra.mxu0 0.0
        %1275 = vmatprep.subr.mxu0 0.0
        %1276 = vmatpush2.msra.mxu0 0.0
        %1277 = vmatprep.subr.mxu0 0.0
        %1278 = vmatpush2.msra.mxu0 0.0
        %1279 = vmatprep.subr.mxu0 0.0
        %1280 = vmatpush2.msra.mxu0 0.0
        %1281 = vmatprep.subr.mxu0 0.0
        %1282 = vmatpush2.msra.mxu0 0.0
        %1283 = vmatprep.subr.mxu0 0.0
        %1284 = vmatpush2.msra.mxu0 0.0
        %1285 = vmatprep.subr.mxu0 0.0
        %1286 = vmatpush2.msra.mxu0 0.0
        %1287 = vmatprep.subr.mxu0 0.0
        %1288 = vmatpush2.msra.mxu0 0.0
        %1289 = vmatprep.subr.mxu0 0.0
        %1290 = vmatpush2.msra.mxu0 0.0
        %1291 = vmatprep.subr.mxu0 0.0
        %1292 = vmatpush2.msra.mxu0 0.0
        %1293 = vmatprep.subr.mxu0 0.0
        %1294 = vmatpush2.msra.mxu0 0.0
        %1295 = vmatprep.mubr.f32.mxu0 0.0
        %v1296 = vand.u32 %v910, 4294901760
        %1297 = vmatmul.mubr.f32.gmra.mxu0 %v1296
        %v1298 = vpop.f32.mrf.mxu0
        %v1299 = vadd.f32 %v1222, %v1298
        %v1300 = vpop.f32.mrf.mxu0
        %1301 = vdwg.mxu0
        %1302 = vmatprep.subr.mxu0 0.0
        %1303 = vmatpush1.msra.mxu0 0.0
        %1304 = vmatprep.subr.mxu0 0.0
        %1305 = vmatpush1.msra.mxu0 0.0
        %1306 = vmatprep.subr.mxu0 0.0
        %1307 = vmatpush1.msra.mxu0 0.0
        %1308 = vmatprep.subr.mxu0 0.0
        %1309 = vmatpush1.msra.mxu0 0.0
        %1310 = vmatprep.subr.mxu0 0.0
        %1311 = vmatpush1.msra.mxu0 0.0
        %1312 = vmatprep.subr.mxu0 0.0
        %1313 = vmatpush1.msra.mxu0 0.0
        %1314 = vmatprep.subr.mxu0 0.0
        %1315 = vmatpush1.msra.mxu0 0.0
        %1316 = vmatprep.subr.mxu0 0.0
        %1317 = vmatpush1.msra.mxu0 0.0
        %1318 = vmatprep.subr.mxu0 0.0
        %1319 = vmatpush1.msra.mxu0 0.0
        %1320 = vmatprep.subr.mxu0 0.0
        %1321 = vmatpush1.msra.mxu0 0.0
        %1322 = vmatprep.subr.mxu0 0.0
        %1323 = vmatpush1.msra.mxu0 0.0
        %1324 = vmatprep.subr.mxu0 0.0
        %1325 = vmatpush1.msra.mxu0 0.0
        %1326 = vmatprep.subr.mxu0 0.0
        %1327 = vmatpush1.msra.mxu0 0.0
        %1328 = vmatprep.subr.mxu0 0.0
        %1329 = vmatpush1.msra.mxu0 0.0
        %1330 = vmatprep.subr.mxu0 0.0
        %v1331 = vand.u32 %v914, 4294901760
        %1332 = vmatpush1.msra.mxu0 %v1331
        %1333 = vmatprep.subr.mxu0 0.0
        %v1334 = vand.u32 %v210, 4294901760
        %1335 = vmatpush1.msra.mxu0 %v1334
        %1336 = vmatprep.subr.mxu0 0.0
        %1337 = vmatpush2.msra.mxu0 0.0
        %1338 = vmatprep.subr.mxu0 0.0
        %1339 = vmatpush2.msra.mxu0 0.0
        %1340 = vmatprep.subr.mxu0 0.0
        %1341 = vmatpush2.msra.mxu0 0.0
        %1342 = vmatprep.subr.mxu0 0.0
        %1343 = vmatpush2.msra.mxu0 0.0
        %1344 = vmatprep.subr.mxu0 0.0
        %1345 = vmatpush2.msra.mxu0 0.0
        %1346 = vmatprep.subr.mxu0 0.0
        %1347 = vmatpush2.msra.mxu0 0.0
        %1348 = vmatprep.subr.mxu0 0.0
        %1349 = vmatpush2.msra.mxu0 0.0
        %1350 = vmatprep.subr.mxu0 0.0
        %1351 = vmatpush2.msra.mxu0 0.0
        %1352 = vmatprep.subr.mxu0 0.0
        %1353 = vmatpush2.msra.mxu0 0.0
        %1354 = vmatprep.subr.mxu0 0.0
        %1355 = vmatpush2.msra.mxu0 0.0
        %1356 = vmatprep.subr.mxu0 0.0
        %1357 = vmatpush2.msra.mxu0 0.0
        %1358 = vmatprep.subr.mxu0 0.0
        %1359 = vmatpush2.msra.mxu0 0.0
        %1360 = vmatprep.subr.mxu0 0.0
        %1361 = vmatpush2.msra.mxu0 0.0
        %1362 = vmatprep.subr.mxu0 0.0
        %1363 = vmatpush2.msra.mxu0 0.0
        %1364 = vmatprep.subr.mxu0 0.0
        %1365 = vmatpush2.msra.mxu0 0.0
        %1366 = vmatprep.subr.mxu0 0.0
        %1367 = vmatpush2.msra.mxu0 0.0
        %1368 = vmatprep.mubr.f32.mxu0 0.0
        %v1369 = vand.u32 %v910, 4294901760
        %1370 = vmatmul.mubr.f32.gmra.mxu0 %v1369
        %v1371 = vpop.f32.mrf.mxu0
        %v1372 = vadd.f32 %v1299, %v1371
        %v1373 = vpop.f32.mrf.mxu0
        %1374 = vdwg.mxu0
        %vm1375 = vcmask 261120
        %1376 = vst.msk [vmem:[%s201] sm:$0xff] %vm1375, %v1372
        %s1377 = sand.u32 %s120, 1
        %s1378 = scalar_lea.sflag [#allocation3], %s1377
        %s1379 = sand.u32 %s120, 1
        %s1380 = smul.addr %s1379, 8
        %s1381 = scalar_lea.vmem [#allocation2], %s1380
        // Predicated region
        $region37: #{tpu_custom_call.1} parent=35 // pred_check
          %p1382 = pneg %p130
        $region38: #{tpu_custom_call.1} parent=35 // pred_check_branch
          %1384 = sbr.rel (%p1382) target = $region40
        $region39: #{tpu_custom_call.1} parent=35 // pred_region
          %s1386 = ssub.s32 128, 128
          %1387 = vsyncadd %s1378, %s1386
          %s1388 = smul.addr %s18, 128
          %s1389 = scalar_lea.hbm %s4, %s1388
          %s1391 = sshll.u32 %s1381, 4
          %s1392 = int_to_ptr.vmem [resolvable:$true] %s1391
          %1394 = dma.vmem_to_hbm [thread:$0]  %s1392, 128, %s1389, %s1378
        $region40: #{tpu_custom_call.1} parent=35 // pred_fallthru
          _
      $region36: #{tpu_custom_call.1} parent=5 // pred_fallthru
        _
      %p1395 = scmp.le.s32.totalorder 2, %s13
      // Predicated region
      $region41: #{tpu_custom_call.1} parent=5 // pred_check
        %p1396 = pneg %p1395
      $region42: #{tpu_custom_call.1} parent=5 // pred_check_branch
        %1398 = sbr.rel (%p1396) target = $region44
      $region43: #{tpu_custom_call.1} parent=5 // pred_region
        %s1399 = ssub.s32 %s13, 2
        // Predicated region
        $region45: #{tpu_custom_call.1} parent=43 // pred_check
          %p1400 = pneg %p136
        $region46: #{tpu_custom_call.1} parent=43 // pred_check_branch
          %1402 = sbr.rel (%p1400) target = $region48
        $region47: #{tpu_custom_call.1} parent=43 // pred_region
          %s1403 = sand.u32 %s121, 1
          %s1404 = scalar_lea.sflag [#allocation3], %s1403
          %s1405 = sand.u32 %s121, 1
          %s1406 = smul.addr %s1405, 8
          %s1407 = scalar_lea.vmem [#allocation2], %s1406
          %1408 = dma.done %s1404, 128
        $region48: #{tpu_custom_call.1} parent=43 // pred_fallthru
          _
      $region44: #{tpu_custom_call.1} parent=5 // pred_fallthru
        _
    $region6: #{tpu_custom_call.1} parent=1 // loop_footer
      %s17 = sadd.s32 1, %s13
    $region7: #{tpu_custom_call.1} parent=1 // loop_footer_branch
      %12 = sbr.rel target = $region3
    $region8: #{tpu_custom_call.1} parent=1 // loop_exit
      _
    %1409 = vsyncpa [#allocation3], 1
    %s1410 = scalar_lea.sflag [#allocation3], 1
    %1411 = vsyncpa %s1410, 1

</llo_original>
